<compile_context>
chip_gen: v5e
topology: v5e:2x2
jax: 0.10.0
libtpu: 0.0.40
codegen_flags: <defaults>
</compile_context>

<pallas_src>
import functools

import jax
import jax.numpy as jnp
from jax import lax
from jax.experimental import pallas as pl
from jax.experimental.pallas import tpu as pltpu

LANES = 128
MAX_BLOCK_ROWS = 1024  # 2 inputs x 2 pipeline buffers x 512 KiB + acc ~ 2.5 MiB VMEM


def _kl_kernel(mu_ref, lv_ref, out_ref, acc_ref, *,
               block_rows, steps_per_part, valid_rows, needs_mask):
    i = pl.program_id(1)  # reduction ("arbitrary") axis

    @pl.when(i == 0)
    def _():
        acc_ref[...] = jnp.zeros_like(acc_ref)

    mu = mu_ref[...].astype(jnp.float32)
    lv = lv_ref[...].astype(jnp.float32)

    if needs_mask:
        p = pl.program_id(0)
        logical_block = p * steps_per_part + i
        row_ids = logical_block * block_rows + lax.broadcasted_iota(
            jnp.int32, (block_rows, LANES), 0)
        valid = row_ids < valid_rows
        # Masked (and zero-padded) elements contribute 0 + 1 - exp(0) - 0 == 0.
        mu = jnp.where(valid, mu, 0.0)
        lv = jnp.where(valid, lv, 0.0)

    # Pure VALU/EUP elementwise work, accumulated lane-parallel in VMEM.
    acc_ref[...] += lv + 1.0 - jnp.exp(lv) - mu * mu

    @pl.when(i == steps_per_part - 1)
    def _():
        out_ref[0, 0] = -0.5 * jnp.sum(acc_ref[...])


def kl_divergence(mu, logvar, *, num_partitions=2):
    assert mu.shape == logvar.shape, "mu and logvar must have the same shape"
    assert mu.dtype == logvar.dtype, "mu and logvar must have the same dtype"
    n = mu.size
    if n == 0:
        return jnp.float32(0.0)
    itemsize = jnp.dtype(mu.dtype).itemsize

    # Flatten (free for contiguous arrays); pad at most LANES-1 zeros so the
    # flat vector reshapes to (rows, 128). Zero padding contributes exactly 0.
    mu_f = mu.reshape(-1)
    lv_f = logvar.reshape(-1)
    n_lane = pl.cdiv(n, LANES) * LANES
    if n_lane != n:
        mu_f = jnp.pad(mu_f, (0, n_lane - n))
        lv_f = jnp.pad(lv_f, (0, n_lane - n))
    rows = n_lane // LANES
    mu2d = mu_f.reshape(rows, LANES)
    lv2d = lv_f.reshape(rows, LANES)

    # Block sizing: full-extent block for small inputs (always a legal block
    # shape, no tail garbage), else 1024-row tiles (near the roofline plateau,
    # well under v7x's 32 MiB scoped VMEM budget).
    block_rows = rows if rows <= MAX_BLOCK_ROWS else MAX_BLOCK_ROWS
    num_blocks = pl.cdiv(rows, block_rows)
    p_parts = max(1, min(num_partitions, num_blocks))
    steps_per_part = pl.cdiv(num_blocks, p_parts)
    # Mask only if some block rows fall outside the array (partial tail block
    # or overshoot blocks from splitting num_blocks across partitions).
    needs_mask = (p_parts * steps_per_part * block_rows) != rows

    def in_map(p, i):
        # Clamp so overshoot blocks (fully masked in-kernel) stay in bounds.
        return (jnp.minimum(p * steps_per_part + i, num_blocks - 1), 0)

    kernel = functools.partial(
        _kl_kernel,
        block_rows=block_rows,
        steps_per_part=steps_per_part,
        valid_rows=rows,
        needs_mask=needs_mask,
    )

    cost = pl.CostEstimate(
        flops=5 * n,
        transcendentals=n,
        bytes_accessed=2 * rows * LANES * itemsize + 4 * p_parts,
    )

    partials = pl.pallas_call(
        kernel,
        out_shape=jax.ShapeDtypeStruct((p_parts, 1), jnp.float32),
        grid_spec=pltpu.PrefetchScalarGridSpec(
            num_scalar_prefetch=0,
            grid=(p_parts, steps_per_part),
            in_specs=[
                pl.BlockSpec((block_rows, LANES), in_map),
                pl.BlockSpec((block_rows, LANES), in_map),
            ],
            out_specs=pl.BlockSpec(
                (1, 1), lambda p, i: (p, 0), memory_space=pltpu.SMEM
            ),
            scratch_shapes=[pltpu.VMEM((block_rows, LANES), jnp.float32)],
        ),
        compiler_params=pltpu.CompilerParams(
            dimension_semantics=("parallel", "arbitrary"),
        ),
        cost_estimate=cost,
    )(mu2d, lv2d)

    return jnp.sum(partials)


def kl_divergence_ref(mu, logvar):
    mu = mu.astype(jnp.float32)
    logvar = logvar.astype(jnp.float32)
    return -0.5 * jnp.sum(logvar + 1.0 - jnp.exp(logvar) - mu ** 2)


if __name__ == "__main__":
    key = jax.random.PRNGKey(0)
    k_mu, k_lv = jax.random.split(key)

    # Typical VAE latent: (batch, latent_dim) — primary (small) check.
    mu = jax.random.normal(k_mu, (2, 32), dtype=jnp.float32)
    logvar = 0.5 * jax.random.normal(k_lv, (2, 32), dtype=jnp.float32)
    out = jax.block_until_ready(kl_divergence(mu, logvar))
    ref = kl_divergence_ref(mu, logvar)
    assert jnp.allclose(out, ref, rtol=1e-5, atol=1e-5), (out, ref)

    # Secondary check exercising the multi-block / parallel-partition / masked
    # tail path (2 blocks of 1024 rows over a 1280-row array).
    k_mu2, k_lv2 = jax.random.split(jax.random.PRNGKey(0), 2)
    mu_big = jax.random.normal(k_mu2, (40, 4096), dtype=jnp.float32)
    logvar_big = 0.5 * jax.random.normal(k_lv2, (40, 4096), dtype=jnp.float32)
    out_big = jax.block_until_ready(kl_divergence(mu_big, logvar_big))
    ref_big = kl_divergence_ref(mu_big, logvar_big)
    assert jnp.allclose(out_big, ref_big, rtol=1e-4, atol=1e-2), (out_big, ref_big)

    print("KERNEL_OK")
</pallas_src>

<mosaic_0001>
module attributes {stable_mosaic.version = 11 : i64} {
  func.func @_kl_kernel(%arg0: i32, %arg1: i32, %arg2: memref<1x128xf32, #tpu.memory_space<vmem>>, %arg3: memref<1x128xf32, #tpu.memory_space<vmem>>, %arg4: memref<1x1xf32, #tpu.memory_space<smem>>, %arg5: memref<1x128xf32, #tpu.memory_space<vmem>>) attributes {dimension_semantics = [#tpu.dimension_semantics<parallel>, #tpu.dimension_semantics<arbitrary>], iteration_bounds = array<i64: 1, 1>, scalar_prefetch = 0 : i64, scratch_operands = 1 : i64, tpu.core_type = #tpu.core_type<tc>, window_params = [{transform_indices = @transform_0, window_bounds = array<i64: 1, 128>}, {transform_indices = @transform_1, window_bounds = array<i64: 1, 128>}, {transform_indices = @transform_2, window_bounds = array<i64: 1, 1>}]} {
    %c0_i32 = arith.constant 0 : i32
    %0 = arith.cmpi eq, %arg1, %c0_i32 : i32
    %1 = arith.extui %0 : i1 to i32
    %c0_i32_0 = arith.constant 0 : i32
    %2 = arith.cmpi ne, %1, %c0_i32_0 : i32
    scf.if %2 {
      %cst_10 = arith.constant 0.000000e+00 : f32
      %17 = vector.broadcast %cst_10 : f32 to vector<1x128xf32>
      %c0_11 = arith.constant 0 : index
      %c0_12 = arith.constant 0 : index
      %18 = vector.load %arg5[%c0_11, %c0_12] : memref<1x128xf32, #tpu.memory_space<vmem>>, vector<1x128xf32>
      tpu.vector_store %arg5[%c0_11, %c0_12], %17 {strides = array<i32>} : memref<1x128xf32, #tpu.memory_space<vmem>>, vector<1x128xf32>,
    } else {
    }
    %c0 = arith.constant 0 : index
    %c0_1 = arith.constant 0 : index
    %3 = vector.load %arg2[%c0, %c0_1] : memref<1x128xf32, #tpu.memory_space<vmem>>, vector<1x128xf32>
    %c0_2 = arith.constant 0 : index
    %c0_3 = arith.constant 0 : index
    %4 = vector.load %arg3[%c0_2, %c0_3] : memref<1x128xf32, #tpu.memory_space<vmem>>, vector<1x128xf32>
    %c0_4 = arith.constant 0 : index
    %c0_5 = arith.constant 0 : index
    %5 = vector.load %arg5[%c0_4, %c0_5] : memref<1x128xf32, #tpu.memory_space<vmem>>, vector<1x128xf32>
    %cst = arith.constant 1.000000e+00 : f32
    %6 = vector.broadcast %cst : f32 to vector<1x128xf32>
    %7 = arith.addf %4, %6 : vector<1x128xf32>
    %8 = math.exp %4 : vector<1x128xf32>
    %9 = arith.subf %7, %8 : vector<1x128xf32>
    %10 = arith.mulf %3, %3 : vector<1x128xf32>
    %11 = arith.subf %9, %10 : vector<1x128xf32>
    %12 = arith.addf %5, %11 : vector<1x128xf32>
    %c0_6 = arith.constant 0 : index
    %c0_7 = arith.constant 0 : index
    %13 = vector.load %arg5[%c0_6, %c0_7] : memref<1x128xf32, #tpu.memory_space<vmem>>, vector<1x128xf32>
    tpu.vector_store %arg5[%c0_6, %c0_7], %12 {strides = array<i32>} : memref<1x128xf32, #tpu.memory_space<vmem>>, vector<1x128xf32>,
    %c0_i32_8 = arith.constant 0 : i32
    %14 = arith.cmpi eq, %arg1, %c0_i32_8 : i32
    %15 = arith.extui %14 : i1 to i32
    %c0_i32_9 = arith.constant 0 : i32
    %16 = arith.cmpi ne, %15, %c0_i32_9 : i32
    scf.if %16 {
      %c0_10 = arith.constant 0 : index
      %c0_11 = arith.constant 0 : index
      %17 = vector.load %arg5[%c0_10, %c0_11] : memref<1x128xf32, #tpu.memory_space<vmem>>, vector<1x128xf32>
      %18 = vector.shape_cast %17 : vector<1x128xf32> to vector<1x1x128xf32>
      %cst_12 = arith.constant dense<0.000000e+00> : vector<1xf32>
      %19 = vector.multi_reduction <add>, %18, %cst_12 [1, 2] : vector<1x1x128xf32> to vector<1xf32>
      %20 = vector.shape_cast %19 : vector<1xf32> to vector<1x1x1xf32>
      %21 = vector.extract %20[0, 0, 0] : f32 from vector<1x1x1xf32>
      %cst_13 = arith.constant -5.000000e-01 : f32
      %22 = arith.mulf %cst_13, %21 : f32
      %c0_14 = arith.constant 0 : index
      %c0_15 = arith.constant 0 : index
      %23 = memref.load %arg4[%c0_14, %c0_15] : memref<1x1xf32, #tpu.memory_space<smem>>
      memref.store %22, %arg4[%c0_14, %c0_15] : memref<1x1xf32, #tpu.memory_space<smem>>
    } else {
    }
    return
  }
  func.func @transform_0(%arg0: i32, %arg1: i32) -> (i32, i32) {
    %c1_i32 = arith.constant 1 : i32
    %0 = arith.muli %arg0, %c1_i32 : i32
    %1 = arith.addi %0, %arg1 : i32
    %c0_i32 = arith.constant 0 : i32
    %2 = arith.minsi %1, %c0_i32 : i32
    %c0_i32_0 = arith.constant 0 : i32
    %c0_i32_1 = arith.constant 0 : i32
    return %2, %c0_i32_0 : i32, i32
  }
  func.func @transform_1(%arg0: i32, %arg1: i32) -> (i32, i32) {
    %c1_i32 = arith.constant 1 : i32
    %0 = arith.muli %arg0, %c1_i32 : i32
    %1 = arith.addi %0, %arg1 : i32
    %c0_i32 = arith.constant 0 : i32
    %2 = arith.minsi %1, %c0_i32 : i32
    %c0_i32_0 = arith.constant 0 : i32
    %c0_i32_1 = arith.constant 0 : i32
    return %2, %c0_i32_0 : i32, i32
  }
  func.func @transform_2(%arg0: i32, %arg1: i32) -> (i32, i32) {
    %c0_i32 = arith.constant 0 : i32
    %c0_i32_0 = arith.constant 0 : i32
    return %arg0, %c0_i32 : i32, i32
  }
}

</mosaic_0001>

<llo_original>
// kernel: tpu_custom_call.1
$region0: #{tpu_custom_call.1}
  #allocation0 [shape = 'u32[]', space=smem, size = 0x4, offset = 0x4, fixed_abs, tag = 'smem constant byte address 0x4 - core index']
  #allocation1 [shape = 'u32[72,128]{1,0:T(1,128)}', space=vmem, size = 0x9000, scoped, tag = 'internal scratch']
  #allocation2 [shape = 'f32[1,128]{1,0:T(1,128)}', space=vmem, size = 0x200, scoped, tag = 'scratch operand']
  %s0 = inlined_call_operand.hbm [shape: f32[1,128], index: 0, kind: input, shape index: {}]
  %s1 = inlined_call_operand.hbm [shape: f32[1,128], index: 1, kind: input, shape index: {}]
  %s2 = inlined_call_operand.hbm [shape: f32[1,1], index: 2, kind: output, shape index: {}]
  %s3 = sld [smem:[#allocation0]]
  $region34: #{tpu_custom_call.1} parent=0
    _
  %s5 = ssub.s32 1, %s3
  %s6 = scalar_select 0, %s5, %s3
  $region1: #{tpu_custom_call.1} parent=0
    #allocation3 [shape = 'u8[512]{0}', space=vmem, size = 0x400, scoped, tag = 'input window, operand 0, single buffered']
    #allocation4 [shape = 's32[1]{0}', space=sflag, size = 0x4, scoped, tag = 'scoped memory for tpu_custom_call.1']
    #allocation5 [shape = 's32[1]{0}', space=sflag, size = 0x4, scoped, tag = 'scoped memory for tpu_custom_call.1']
    #allocation6 [shape = 'u8[512]{0}', space=vmem, size = 0x400, scoped, tag = 'input window, operand 1, single buffered']
    #allocation7 [shape = 's32[1]{0}', space=sflag, size = 0x4, scoped, tag = 'scoped memory for tpu_custom_call.1']
    #allocation8 [shape = 'u8[512]{0}', space=smem, size = 0x200, scoped, tag = 'output window, operand 0, single buffered']
    %7 = vsyncpa [#allocation4], 0
    %8 = vsyncpa [#allocation7], 0
    %9 = vsyncpa [#allocation5], 0
    // Predicated region
    $region2: #{tpu_custom_call.1} parent=1 // pred_check
      _
    $region3: #{tpu_custom_call.1} parent=1 // pred_check_branch
      %11 = sbr.rel (0) target = $region5
    $region4: #{tpu_custom_call.1} parent=1 // pred_region
      %s12 = sadd.s32 0, 0
      %p13 = scmp.lt.s32.totalorder %s12, 0
      %s14 = scalar_select %p13, %s12, 0
      %16 = vsyncadd [#allocation4], 0
      %s17 = scalar_lea.hbm %s0, %s14
      %s19 = sshll.u32 %s17, 4
      %s20 = int_to_ptr.hbm [resolvable:$true] %s19
      %s21 = sshll.u32 [#allocation3], 4
      %s22 = int_to_ptr.vmem [resolvable:$true] %s21
      %24 = dma.hbm_to_vmem [thread:$0]  %s20, 16, %s22, [#allocation4]
    $region5: #{tpu_custom_call.1} parent=1 // pred_fallthru
      _
    // Predicated region
    $region6: #{tpu_custom_call.1} parent=1 // pred_check
      _
    $region7: #{tpu_custom_call.1} parent=1 // pred_check_branch
      %26 = sbr.rel (0) target = $region9
    $region8: #{tpu_custom_call.1} parent=1 // pred_region
      %s27 = sadd.s32 0, 0
      %p28 = scmp.lt.s32.totalorder %s27, 0
      %s29 = scalar_select %p28, %s27, 0
      %31 = vsyncadd [#allocation7], 0
      %s32 = scalar_lea.hbm %s1, %s29
      %s34 = sshll.u32 %s32, 4
      %s35 = int_to_ptr.hbm [resolvable:$true] %s34
      %s36 = sshll.u32 [#allocation6], 4
      %s37 = int_to_ptr.vmem [resolvable:$true] %s36
      %39 = dma.hbm_to_vmem [thread:$0]  %s35, 16, %s37, [#allocation7]
    $region9: #{tpu_custom_call.1} parent=1 // pred_fallthru
      _
    // Predicated region
    $region10: #{tpu_custom_call.1} parent=1 // pred_check
      _
    $region11: #{tpu_custom_call.1} parent=1 // pred_check_branch
      %41 = sbr.rel (0) target = $region13
    $region12: #{tpu_custom_call.1} parent=1 // pred_region
      %43 = dma.done [#allocation4], 16
    $region13: #{tpu_custom_call.1} parent=1 // pred_fallthru
      _
    // Predicated region
    $region14: #{tpu_custom_call.1} parent=1 // pred_check
      _
    $region15: #{tpu_custom_call.1} parent=1 // pred_check_branch
      %45 = sbr.rel (0) target = $region17
    $region16: #{tpu_custom_call.1} parent=1 // pred_region
      %47 = dma.done [#allocation7], 16
    $region17: #{tpu_custom_call.1} parent=1 // pred_fallthru
      _
    %s48 = sadd.s32 0, 0
    %p49 = scmp.lt.s32.totalorder %s48, 0
    %s50 = scalar_select %p49, %s48, 0
    %s51 = sadd.s32 0, 0
    %p52 = scmp.lt.s32.totalorder %s51, 0
    %s53 = scalar_select %p52, %s51, 0
    %p54 = scmp.eq.s32.totalorder 0, 0
    // Predicated region
    $region18: #{tpu_custom_call.1} parent=1 // pred_check
      %p55 = pneg %p54
    $region19: #{tpu_custom_call.1} parent=1 // pred_check_branch
      %57 = sbr.rel (%p55) target = $region21
    $region20: #{tpu_custom_call.1} parent=1 // pred_region
      %58 = vst [vmem:[#allocation2] sm:$0x1] 0.0
    $region21: #{tpu_custom_call.1} parent=1 // pred_fallthru
      _
    %v59 = vld [vmem:[#allocation3] sm:$0x1]
    %v60 = vld [vmem:[#allocation6] sm:$0x1]
    %v61 = vld [vmem:[#allocation2] sm:$0x1]
    %v62 = vadd.f32 %v60, 1.0
    %v63 = vmul.f32 %v60, 1.442695
    %v64 = vpow.pop %v63
    %v65 = vsub.f32 %v62, %v64
    %v66 = vmul.f32 %v59, %v59
    %v67 = vsub.f32 %v65, %v66
    %v68 = vadd.f32 %v61, %v67
    %69 = vst [vmem:[#allocation2] sm:$0x1] %v68
    // Predicated region
    $region22: #{tpu_custom_call.1} parent=1 // pred_check
      %p70 = pneg %p54
    $region23: #{tpu_custom_call.1} parent=1 // pred_check_branch
      %72 = sbr.rel (%p70) target = $region25
    $region24: #{tpu_custom_call.1} parent=1 // pred_region
      %v73 = vld [vmem:[#allocation2] sm:$0x1]
      %vm74 = vcmask 1040384
      %v75 = vsel %vm74, %v73, 0.0
      %76 = vadd.xlane.f32.xlu0 %v75
      %v77 = vpop.xlane.xlu0 %76
      %v78 = vrot.slane %v77, 4
      %v79 = vadd.f32 %v77, %v78
      %v80 = vrot.slane %v79, 2
      %v81 = vadd.f32 %v79, %v80
      %v82 = vrot.slane %v81, 1
      %v83 = vadd.f32 %v81, %v82
      %s84 = vtos %v83
      %s85 = smul.f32 %s84, -0.5
      %s86 = scalar_lea.smem [#allocation8], 0
      %87 = sst [smem:[%s86]] %s85
    $region25: #{tpu_custom_call.1} parent=1 // pred_fallthru
      _
    // Predicated region
    $region26: #{tpu_custom_call.1} parent=1 // pred_check
      _
    $region27: #{tpu_custom_call.1} parent=1 // pred_check_branch
      %89 = sbr.rel (0) target = $region29
    $region28: #{tpu_custom_call.1} parent=1 // pred_region
      %91 = vsyncadd [#allocation5], 0
      %s93 = sshll.u32 %s2, 4
      %s94 = int_to_ptr.hbm [resolvable:$true] %s93
      %96 = dma.smem_to_hbm [#allocation8], 16, %s94, [#allocation5]
    $region29: #{tpu_custom_call.1} parent=1 // pred_fallthru
      _
    // Predicated region
    $region30: #{tpu_custom_call.1} parent=1 // pred_check
      _
    $region31: #{tpu_custom_call.1} parent=1 // pred_check_branch
      %98 = sbr.rel (0) target = $region33
    $region32: #{tpu_custom_call.1} parent=1 // pred_region
      %100 = dma.done [#allocation5], 16
    $region33: #{tpu_custom_call.1} parent=1 // pred_fallthru
      _
    %101 = sfence
    %102 = vsyncpa [#allocation4], 1
    %103 = vsyncpa [#allocation7], 1
    %104 = vsyncpa [#allocation5], 1

</llo_original>
